<compile_context>
chip_gen: v5e
topology: v5e:2x2
jax: 0.10.0
libtpu: 0.0.40
codegen_flags: <defaults>
</compile_context>

<pallas_src>
import functools

import jax
import jax.numpy as jnp
import numpy as np
from jax.experimental import pallas as pl
from jax.experimental.pallas import tpu as pltpu

LANE = 128
ROWS = 16          # batch-tile granularity: legal sublane tiling for f32 and bf16


def _round_up(x, m):
    return ((x + m - 1) // m) * m


# ----------------------------------------------------------------------------
# Kernel
# ----------------------------------------------------------------------------
def actor_forward_kernel(x_ref, w1_ref, w2_ref, wmu_ref, p_ref, out_ref,
                         *, fc1_dims, fc2_dims):
    """One batch tile: fc1 -> LN -> relu -> fc2 -> LN -> relu -> mu -> tanh."""
    eps = 1e-5
    f1p = w1_ref.shape[-1]        # padded fc1 width (128)
    f2p = w2_ref.shape[-1]        # padded fc2 width (128)
    n_actions = out_ref.shape[-1]   # TRUE action count (unpadded output)
    cdtype = w1_ref.dtype           # streamed / MXU-input dtype (f32 or bf16)

    # Packed (1, dim) parameter rows, kept in f32 (tiny, resident).
    b1 = p_ref[0:1, :f1p]
    g1 = p_ref[1:2, :f1p]
    be1 = p_ref[2:3, :f1p]
    b2 = p_ref[3:4, :f2p]
    g2 = p_ref[4:5, :f2p]
    be2 = p_ref[5:6, :f2p]
    bmu = p_ref[6:7, :]

    def ln_relu(h, n_true, g, be):
        # h is f32, shape (tile_b, p) with p >= n_true.  Centered two-pass
        # variance over the TRUE feature count; padded lanes are masked out of
        # the statistics and forced to 0 before the affine, so correctness does
        # not depend on what lives in the padded bias/gamma/beta lanes.
        p = h.shape[-1]
        inv_n = 1.0 / float(n_true)
        if p == n_true:
            hm = h
            mask = None
        else:
            lane = jax.lax.broadcasted_iota(jnp.int32, (1, p), 1)
            mask = lane < n_true
            hm = jnp.where(mask, h, 0.0)
        mu = jnp.sum(hm, axis=-1, keepdims=True) * inv_n
        d = hm - mu
        if mask is not None:
            d = jnp.where(mask, d, 0.0)
        var = jnp.sum(d * d, axis=-1, keepdims=True) * inv_n
        y = d * jax.lax.rsqrt(var + eps)
        return jnp.maximum(y * g + be, 0.0)        # padded lanes stay 0

    x = x_ref[...]

    # --- fc1 + LayerNorm + relu (f32 accumulate / f32 LN math) --------------
    h = jnp.dot(x, w1_ref[...], preferred_element_type=jnp.float32) + b1
    h = ln_relu(h, fc1_dims, g1, be1)

    # --- fc2 + LayerNorm + relu ---------------------------------------------
    h = jnp.dot(h.astype(cdtype), w2_ref[...],
                preferred_element_type=jnp.float32) + b2
    h = ln_relu(h, fc2_dims, g2, be2)

    # --- mu head + tanh -------------------------------------------------------
    o = jnp.dot(h.astype(cdtype), wmu_ref[...],
                preferred_element_type=jnp.float32) + bmu
    # Only the true action lanes are written back (no 128-lane amplification).
    out_ref[...] = jnp.tanh(o[:, :n_actions]).astype(out_ref.dtype)


# ----------------------------------------------------------------------------
# Parameter handling
# ----------------------------------------------------------------------------
def init_params(key, input_dim, fc1_dims, fc2_dims, n_actions):
    """Raw parameters in PyTorch layout ((out, in) weights, 1-D vectors)."""
    k1, k2, k3, k4, k5, k6 = jax.random.split(key, 6)
    f1 = 1.0 / np.sqrt(fc1_dims)   # fc1.weight.size()[0] == fc1_dims
    f2 = 1.0 / np.sqrt(fc2_dims)
    f3 = 0.003
    return {
        "w1": jax.random.uniform(k1, (fc1_dims, input_dim), jnp.float32, -f1, f1),
        "b1": jax.random.uniform(k2, (fc1_dims,), jnp.float32, -f1, f1),
        "gamma1": jnp.ones((fc1_dims,), jnp.float32),
        "beta1": jnp.zeros((fc1_dims,), jnp.float32),
        "w2": jax.random.uniform(k3, (fc2_dims, fc1_dims), jnp.float32, -f2, f2),
        "b2": jax.random.uniform(k4, (fc2_dims,), jnp.float32, -f2, f2),
        "gamma2": jnp.ones((fc2_dims,), jnp.float32),
        "beta2": jnp.zeros((fc2_dims,), jnp.float32),
        "w_mu": jax.random.uniform(k5, (n_actions, fc2_dims), jnp.float32, -f3, f3),
        "b_mu": jax.random.uniform(k6, (n_actions,), jnp.float32, -f3, f3),
    }


def pack_params(raw, input_dim, fc1_dims, fc2_dims, n_actions,
                dtype=jnp.float32):
    """Transpose + zero-pad weights to lane-dense shapes, pack small vectors.

    `dtype` is the streamed / MXU-input dtype (use jnp.bfloat16 to halve HBM
    traffic of the memory-bound forward).  The packed bias / LN vector slab is
    kept in f32: it is tiny, resident, and keeps the LN affine exact.
    """
    f1p = _round_up(fc1_dims, LANE)
    f2p = _round_up(fc2_dims, LANE)
    nap = _round_up(n_actions, LANE)
    pmax = max(f1p, f2p, nap)

    def pad2(a, r, c):
        return jnp.pad(a, ((0, r - a.shape[0]), (0, c - a.shape[1]))).astype(dtype)

    def row(v, pad_to):
        return jnp.pad(v.astype(jnp.float32), (0, pad_to - v.shape[0]))

    packed = jnp.stack(
        [
            row(raw["b1"], pmax),
            row(raw["gamma1"], pmax),
            row(raw["beta1"], pmax),
            row(raw["b2"], pmax),
            row(raw["gamma2"], pmax),
            row(raw["beta2"], pmax),
            row(raw["b_mu"], pmax),
            jnp.zeros((pmax,), jnp.float32),   # pad to 8 sublanes
        ],
        axis=0,
    )

    w1_t = pad2(jnp.transpose(raw["w1"]), input_dim, f1p)    # (in,  f1p)
    w2_t = pad2(jnp.transpose(raw["w2"]), f1p, f2p)          # (f1p, f2p)
    wmu_t = pad2(jnp.transpose(raw["w_mu"]), f2p, nap)       # (f2p, nap)

    # Zero-padding invariants (init-time host check).  The kernel masks the LN
    # statistics itself, but the padded *rows* of w2_t / wmu_t must be zero so
    # padded activation lanes contribute nothing to the next matmul.
    assert not np.any(np.asarray(w2_t, dtype=np.float32)[fc1_dims:, :])
    assert not np.any(np.asarray(wmu_t, dtype=np.float32)[fc2_dims:, :])
    pk = np.asarray(packed)
    assert not np.any(pk[0:3, fc1_dims:]) and not np.any(pk[3:6, fc2_dims:])
    assert not np.any(pk[6, n_actions:])

    return {"w1_t": w1_t, "w2_t": w2_t, "w_mu_t": wmu_t, "packed": packed}


# ----------------------------------------------------------------------------
# Wrapper
# ----------------------------------------------------------------------------
def actor_forward(state, kparams, *, fc1_dims, fc2_dims, n_actions, tile_b=None):
    B, input_dim = state.shape
    cdtype = kparams["w1_t"].dtype
    if state.dtype != cdtype:
        # In production feed the state already in the streamed dtype.
        state = state.astype(cdtype)

    f1p = kparams["w1_t"].shape[-1]
    f2p = kparams["w2_t"].shape[-1]
    nap = kparams["w_mu_t"].shape[-1]
    pmax = kparams["packed"].shape[-1]

    # Batch tile: >=2 roughly-equal grid steps (both v7x TensorCores get work
    # on the "parallel" axis) while keeping tiles fat (<=1024 rows) so the
    # single-TC chips (v5e/v6e) amortize per-step overhead.  No batch padding:
    # the ragged last block is handled by Pallas (row-wise math; OOB writes
    # dropped).
    if tile_b is None:
        tile_b = min(1024, _round_up(-(-B // 2), ROWS))
    if tile_b >= B:
        tile_b = B                      # single full block (any B is legal)
    else:
        tile_b = _round_up(tile_b, ROWS)
    grid = (pl.cdiv(B, tile_b),)

    kernel = functools.partial(
        actor_forward_kernel, fc1_dims=fc1_dims, fc2_dims=fc2_dims)

    in_specs = [
        pl.BlockSpec((tile_b, input_dim), lambda i: (i, 0)),  # state: batch tiled
        pl.BlockSpec((input_dim, f1p), lambda i: (0, 0)),     # weights resident
        pl.BlockSpec((f1p, f2p), lambda i: (0, 0)),
        pl.BlockSpec((f2p, nap), lambda i: (0, 0)),
        pl.BlockSpec((8, pmax), lambda i: (0, 0)),            # packed vectors
    ]
    # Output emitted directly as (B, n_actions); last dim equals the full
    # array dim so the sub-128 block is legal, and HBM writeback is 32x
    # smaller than a 128-lane padded slab.
    out_spec = pl.BlockSpec((tile_b, n_actions), lambda i: (i, 0))

    itemsize = jnp.dtype(cdtype).itemsize
    flops = int(2 * B * (input_dim * f1p + f1p * f2p + f2p * nap))
    transcendentals = int(B * (2 + n_actions))      # 2 rsqrt + tanh per row
    bytes_accessed = int(
        itemsize * (state.size
                    + kparams["w1_t"].size + kparams["w2_t"].size
                    + kparams["w_mu_t"].size + B * n_actions)
        + 4 * kparams["packed"].size)

    return pl.pallas_call(
        kernel,
        out_shape=jax.ShapeDtypeStruct((B, n_actions), cdtype),
        grid=grid,
        in_specs=in_specs,
        out_specs=out_spec,
        compiler_params=pltpu.CompilerParams(
            dimension_semantics=("parallel",)),
        cost_estimate=pl.CostEstimate(
            flops=flops,
            transcendentals=transcendentals,
            bytes_accessed=bytes_accessed),
    )(state, kparams["w1_t"], kparams["w2_t"], kparams["w_mu_t"],
      kparams["packed"])


# ----------------------------------------------------------------------------
# Pure-JAX reference (PyTorch semantics, f32)
# ----------------------------------------------------------------------------
def actor_forward_ref(state, raw):
    eps = 1e-5

    def ln(h, g, b):
        m = jnp.mean(h, axis=-1, keepdims=True)
        v = jnp.mean((h - m) ** 2, axis=-1, keepdims=True)
        return (h - m) / jnp.sqrt(v + eps) * g + b

    h = state @ raw["w1"].T + raw["b1"]
    h = jnp.maximum(ln(h, raw["gamma1"], raw["beta1"]), 0.0)
    h = h @ raw["w2"].T + raw["b2"]
    h = jnp.maximum(ln(h, raw["gamma2"], raw["beta2"]), 0.0)
    return jnp.tanh(h @ raw["w_mu"].T + raw["b_mu"])


# ----------------------------------------------------------------------------
if __name__ == "__main__":
    input_dim, fc1_dims, fc2_dims, n_actions = 8, 32, 32, 4

    key = jax.random.PRNGKey(0)
    k_state, k_params, k_big = jax.random.split(key, 3)

    raw = init_params(k_params, input_dim, fc1_dims, fc2_dims, n_actions)

    # ---- exact path (f32 streaming), small batch, single grid step ---------
    kp32 = pack_params(raw, input_dim, fc1_dims, fc2_dims, n_actions,
                       dtype=jnp.float32)
    state = jax.random.normal(k_state, (4, input_dim), jnp.float32)
    out = actor_forward(state, kp32, fc1_dims=fc1_dims, fc2_dims=fc2_dims,
                        n_actions=n_actions)
    out = jax.block_until_ready(out)
    assert out.shape == (4, n_actions)
    ref = actor_forward_ref(state, raw)
    np.testing.assert_allclose(np.asarray(out), np.asarray(ref),
                               rtol=1e-4, atol=2e-5)

    # ---- fast path (bf16 streaming, f32 accumulate), ragged batch ----------
    # B=300 -> tile_b=160 -> grid=(2,): exercises the >=2-step "parallel" grid
    # (v7x megacore) and the ragged last block (no wrapper pad / slice).
    kp16 = pack_params(raw, input_dim, fc1_dims, fc2_dims, n_actions,
                       dtype=jnp.bfloat16)
    state_big = jax.random.normal(k_big, (300, input_dim), jnp.float32)
    out_big = actor_forward(state_big.astype(jnp.bfloat16), kp16,
                            fc1_dims=fc1_dims, fc2_dims=fc2_dims,
                            n_actions=n_actions)
    out_big = jax.block_until_ready(out_big)
    assert out_big.shape == (300, n_actions)
    ref_big = actor_forward_ref(state_big, raw)
    np.testing.assert_allclose(
        np.asarray(jnp.asarray(out_big, dtype=jnp.float32)),
        np.asarray(ref_big), rtol=5e-2, atol=1e-2)

    print("KERNEL_OK")
</pallas_src>

<mosaic_0001>
module attributes {stable_mosaic.version = 11 : i64} {
  func.func @actor_forward_kernel(%arg0: i32, %arg1: memref<4x8xf32, #tpu.memory_space<vmem>>, %arg2: memref<8x128xf32, #tpu.memory_space<vmem>>, %arg3: memref<128x128xf32, #tpu.memory_space<vmem>>, %arg4: memref<128x128xf32, #tpu.memory_space<vmem>>, %arg5: memref<8x128xf32, #tpu.memory_space<vmem>>, %arg6: memref<4x4xf32, #tpu.memory_space<vmem>>) attributes {dimension_semantics = [#tpu.dimension_semantics<parallel>], iteration_bounds = array<i64: 1>, scalar_prefetch = 0 : i64, scratch_operands = 0 : i64, tpu.core_type = #tpu.core_type<tc>, window_params = [{transform_indices = @transform_0, window_bounds = array<i64: 4, 8>}, {pipeline_mode = #tpu.pipeline_mode<synchronous>, transform_indices = @transform_1, window_bounds = array<i64: 8, 128>}, {pipeline_mode = #tpu.pipeline_mode<synchronous>, transform_indices = @transform_2, window_bounds = array<i64: 128, 128>}, {pipeline_mode = #tpu.pipeline_mode<synchronous>, transform_indices = @transform_3, window_bounds = array<i64: 128, 128>}, {pipeline_mode = #tpu.pipeline_mode<synchronous>, transform_indices = @transform_4, window_bounds = array<i64: 8, 128>}, {transform_indices = @transform_5, window_bounds = array<i64: 4, 4>}]} {
    %c0 = arith.constant 0 : index
    %c0_0 = arith.constant 0 : index
    %0 = vector.load %arg5[%c0, %c0_0] : memref<8x128xf32, #tpu.memory_space<vmem>>, vector<1x128xf32>
    %c1 = arith.constant 1 : index
    %c0_1 = arith.constant 0 : index
    %1 = vector.load %arg5[%c1, %c0_1] : memref<8x128xf32, #tpu.memory_space<vmem>>, vector<1x128xf32>
    %c2 = arith.constant 2 : index
    %c0_2 = arith.constant 0 : index
    %2 = vector.load %arg5[%c2, %c0_2] : memref<8x128xf32, #tpu.memory_space<vmem>>, vector<1x128xf32>
    %c3 = arith.constant 3 : index
    %c0_3 = arith.constant 0 : index
    %3 = vector.load %arg5[%c3, %c0_3] : memref<8x128xf32, #tpu.memory_space<vmem>>, vector<1x128xf32>
    %c4 = arith.constant 4 : index
    %c0_4 = arith.constant 0 : index
    %4 = vector.load %arg5[%c4, %c0_4] : memref<8x128xf32, #tpu.memory_space<vmem>>, vector<1x128xf32>
    %c5 = arith.constant 5 : index
    %c0_5 = arith.constant 0 : index
    %5 = vector.load %arg5[%c5, %c0_5] : memref<8x128xf32, #tpu.memory_space<vmem>>, vector<1x128xf32>
    %c6 = arith.constant 6 : index
    %c0_6 = arith.constant 0 : index
    %6 = vector.load %arg5[%c6, %c0_6] : memref<8x128xf32, #tpu.memory_space<vmem>>, vector<1x128xf32>
    %c0_7 = arith.constant 0 : index
    %c0_8 = arith.constant 0 : index
    %7 = vector.load %arg1[%c0_7, %c0_8] : memref<4x8xf32, #tpu.memory_space<vmem>>, vector<4x8xf32>
    %c0_9 = arith.constant 0 : index
    %c0_10 = arith.constant 0 : index
    %8 = vector.load %arg2[%c0_9, %c0_10] : memref<8x128xf32, #tpu.memory_space<vmem>>, vector<8x128xf32>
    %cst = arith.constant dense<0.000000e+00> : vector<4x128xf32>
    %9 = tpu.matmul %7, %8, %cst {dimension_numbers = #tpu.dot_dimension_numbers<[1], [0], [0], [1], [0, 0, 1, 1], [], []>} : vector<4x8xf32>, vector<8x128xf32>, vector<4x128xf32> -> vector<4x128xf32>
    %10 = vector.broadcast %0 : vector<1x128xf32> to vector<4x128xf32>
    %11 = arith.addf %9, %10 : vector<4x128xf32>
    %12 = tpu.iota {dimensions = array<i32: 1>} : vector<1x128xi32>
    %c32_i32 = arith.constant 32 : i32
    %13 = vector.broadcast %c32_i32 : i32 to vector<1x128xi32>
    %14 = arith.cmpi slt, %12, %13 : vector<1x128xi32>
    %cst_11 = arith.constant 0.000000e+00 : f32
    %15 = vector.shape_cast %14 : vector<1x128xi1> to vector<1x128xi1>
    %16 = vector.broadcast %15 : vector<1x128xi1> to vector<4x128xi1>
    %17 = vector.broadcast %cst_11 : f32 to vector<4x128xf32>
    %18 = arith.select %16, %11, %17 : vector<4x128xi1>, vector<4x128xf32>
    %cst_12 = arith.constant dense<0.000000e+00> : vector<4xf32>
    %19 = vector.multi_reduction <add>, %18, %cst_12 [1] : vector<4x128xf32> to vector<4xf32>
    %20 = vector.shape_cast %19 : vector<4xf32> to vector<4x1xf32>
    %cst_13 = arith.constant 3.125000e-02 : f32
    %21 = vector.broadcast %cst_13 : f32 to vector<4x1xf32>
    %22 = arith.mulf %20, %21 : vector<4x1xf32>
    %23 = vector.broadcast %22 : vector<4x1xf32> to vector<4x128xf32>
    %24 = arith.subf %18, %23 : vector<4x128xf32>
    %cst_14 = arith.constant 0.000000e+00 : f32
    %25 = vector.shape_cast %14 : vector<1x128xi1> to vector<1x128xi1>
    %26 = vector.broadcast %25 : vector<1x128xi1> to vector<4x128xi1>
    %27 = vector.broadcast %cst_14 : f32 to vector<4x128xf32>
    %28 = arith.select %26, %24, %27 : vector<4x128xi1>, vector<4x128xf32>
    %29 = arith.mulf %28, %28 : vector<4x128xf32>
    %cst_15 = arith.constant dense<0.000000e+00> : vector<4xf32>
    %30 = vector.multi_reduction <add>, %29, %cst_15 [1] : vector<4x128xf32> to vector<4xf32>
    %31 = vector.shape_cast %30 : vector<4xf32> to vector<4x1xf32>
    %cst_16 = arith.constant 3.125000e-02 : f32
    %32 = vector.broadcast %cst_16 : f32 to vector<4x1xf32>
    %33 = arith.mulf %31, %32 : vector<4x1xf32>
    %cst_17 = arith.constant 9.99999974E-6 : f32
    %34 = vector.broadcast %cst_17 : f32 to vector<4x1xf32>
    %35 = arith.addf %33, %34 : vector<4x1xf32>
    %36 = math.rsqrt %35 : vector<4x1xf32>
    %37 = vector.broadcast %36 : vector<4x1xf32> to vector<4x128xf32>
    %38 = arith.mulf %28, %37 : vector<4x128xf32>
    %39 = vector.broadcast %1 : vector<1x128xf32> to vector<4x128xf32>
    %40 = arith.mulf %38, %39 : vector<4x128xf32>
    %41 = vector.broadcast %2 : vector<1x128xf32> to vector<4x128xf32>
    %42 = arith.addf %40, %41 : vector<4x128xf32>
    %cst_18 = arith.constant 0.000000e+00 : f32
    %43 = vector.broadcast %cst_18 : f32 to vector<4x128xf32>
    %44 = arith.maximumf %42, %43 : vector<4x128xf32>
    %c0_19 = arith.constant 0 : index
    %c0_20 = arith.constant 0 : index
    %45 = vector.load %arg3[%c0_19, %c0_20] : memref<128x128xf32, #tpu.memory_space<vmem>>, vector<128x128xf32>
    %cst_21 = arith.constant dense<0.000000e+00> : vector<4x128xf32>
    %46 = tpu.matmul %44, %45, %cst_21 {dimension_numbers = #tpu.dot_dimension_numbers<[1], [0], [0], [1], [0, 0, 1, 1], [], []>} : vector<4x128xf32>, vector<128x128xf32>, vector<4x128xf32> -> vector<4x128xf32>
    %47 = vector.broadcast %3 : vector<1x128xf32> to vector<4x128xf32>
    %48 = arith.addf %46, %47 : vector<4x128xf32>
    %49 = tpu.iota {dimensions = array<i32: 1>} : vector<1x128xi32>
    %c32_i32_22 = arith.constant 32 : i32
    %50 = vector.broadcast %c32_i32_22 : i32 to vector<1x128xi32>
    %51 = arith.cmpi slt, %49, %50 : vector<1x128xi32>
    %cst_23 = arith.constant 0.000000e+00 : f32
    %52 = vector.shape_cast %51 : vector<1x128xi1> to vector<1x128xi1>
    %53 = vector.broadcast %52 : vector<1x128xi1> to vector<4x128xi1>
    %54 = vector.broadcast %cst_23 : f32 to vector<4x128xf32>
    %55 = arith.select %53, %48, %54 : vector<4x128xi1>, vector<4x128xf32>
    %cst_24 = arith.constant dense<0.000000e+00> : vector<4xf32>
    %56 = vector.multi_reduction <add>, %55, %cst_24 [1] : vector<4x128xf32> to vector<4xf32>
    %57 = vector.shape_cast %56 : vector<4xf32> to vector<4x1xf32>
    %cst_25 = arith.constant 3.125000e-02 : f32
    %58 = vector.broadcast %cst_25 : f32 to vector<4x1xf32>
    %59 = arith.mulf %57, %58 : vector<4x1xf32>
    %60 = vector.broadcast %59 : vector<4x1xf32> to vector<4x128xf32>
    %61 = arith.subf %55, %60 : vector<4x128xf32>
    %cst_26 = arith.constant 0.000000e+00 : f32
    %62 = vector.shape_cast %51 : vector<1x128xi1> to vector<1x128xi1>
    %63 = vector.broadcast %62 : vector<1x128xi1> to vector<4x128xi1>
    %64 = vector.broadcast %cst_26 : f32 to vector<4x128xf32>
    %65 = arith.select %63, %61, %64 : vector<4x128xi1>, vector<4x128xf32>
    %66 = arith.mulf %65, %65 : vector<4x128xf32>
    %cst_27 = arith.constant dense<0.000000e+00> : vector<4xf32>
    %67 = vector.multi_reduction <add>, %66, %cst_27 [1] : vector<4x128xf32> to vector<4xf32>
    %68 = vector.shape_cast %67 : vector<4xf32> to vector<4x1xf32>
    %cst_28 = arith.constant 3.125000e-02 : f32
    %69 = vector.broadcast %cst_28 : f32 to vector<4x1xf32>
    %70 = arith.mulf %68, %69 : vector<4x1xf32>
    %cst_29 = arith.constant 9.99999974E-6 : f32
    %71 = vector.broadcast %cst_29 : f32 to vector<4x1xf32>
    %72 = arith.addf %70, %71 : vector<4x1xf32>
    %73 = math.rsqrt %72 : vector<4x1xf32>
    %74 = vector.broadcast %73 : vector<4x1xf32> to vector<4x128xf32>
    %75 = arith.mulf %65, %74 : vector<4x128xf32>
    %76 = vector.broadcast %4 : vector<1x128xf32> to vector<4x128xf32>
    %77 = arith.mulf %75, %76 : vector<4x128xf32>
    %78 = vector.broadcast %5 : vector<1x128xf32> to vector<4x128xf32>
    %79 = arith.addf %77, %78 : vector<4x128xf32>
    %cst_30 = arith.constant 0.000000e+00 : f32
    %80 = vector.broadcast %cst_30 : f32 to vector<4x128xf32>
    %81 = arith.maximumf %79, %80 : vector<4x128xf32>
    %c0_31 = arith.constant 0 : index
    %c0_32 = arith.constant 0 : index
    %82 = vector.load %arg4[%c0_31, %c0_32] : memref<128x128xf32, #tpu.memory_space<vmem>>, vector<128x128xf32>
    %cst_33 = arith.constant dense<0.000000e+00> : vector<4x128xf32>
    %83 = tpu.matmul %81, %82, %cst_33 {dimension_numbers = #tpu.dot_dimension_numbers<[1], [0], [0], [1], [0, 0, 1, 1], [], []>} : vector<4x128xf32>, vector<128x128xf32>, vector<4x128xf32> -> vector<4x128xf32>
    %84 = vector.broadcast %6 : vector<1x128xf32> to vector<4x128xf32>
    %85 = arith.addf %83, %84 : vector<4x128xf32>
    %86 = vector.extract_strided_slice %85 {offsets = [0, 0], sizes = [4, 4], strides = [1, 1]} : vector<4x128xf32> to vector<4x4xf32>
    %87 = math.tanh %86 : vector<4x4xf32>
    %c0_34 = arith.constant 0 : index
    %c0_35 = arith.constant 0 : index
    %88 = vector.load %arg6[%c0_34, %c0_35] : memref<4x4xf32, #tpu.memory_space<vmem>>, vector<4x4xf32>
    tpu.vector_store %arg6[%c0_34, %c0_35], %87 {strides = array<i32>} : memref<4x4xf32, #tpu.memory_space<vmem>>, vector<4x4xf32>,
    return
  }
  func.func @transform_0(%arg0: i32) -> (i32, i32) {
    %c0_i32 = arith.constant 0 : i32
    %c0_i32_0 = arith.constant 0 : i32
    return %arg0, %c0_i32 : i32, i32
  }
  func.func @transform_1(%arg0: i32) -> (i32, i32) {
    %c0_i32 = arith.constant 0 : i32
    %c0_i32_0 = arith.constant 0 : i32
    %c0_i32_1 = arith.constant 0 : i32
    return %c0_i32, %c0_i32_0 : i32, i32
  }
  func.func @transform_2(%arg0: i32) -> (i32, i32) {
    %c0_i32 = arith.constant 0 : i32
    %c0_i32_0 = arith.constant 0 : i32
    %c0_i32_1 = arith.constant 0 : i32
    return %c0_i32, %c0_i32_0 : i32, i32
  }
  func.func @transform_3(%arg0: i32) -> (i32, i32) {
    %c0_i32 = arith.constant 0 : i32
    %c0_i32_0 = arith.constant 0 : i32
    %c0_i32_1 = arith.constant 0 : i32
    return %c0_i32, %c0_i32_0 : i32, i32
  }
  func.func @transform_4(%arg0: i32) -> (i32, i32) {
    %c0_i32 = arith.constant 0 : i32
    %c0_i32_0 = arith.constant 0 : i32
    %c0_i32_1 = arith.constant 0 : i32
    return %c0_i32, %c0_i32_0 : i32, i32
  }
  func.func @transform_5(%arg0: i32) -> (i32, i32) {
    %c0_i32 = arith.constant 0 : i32
    %c0_i32_0 = arith.constant 0 : i32
    return %arg0, %c0_i32 : i32, i32
  }
}

</mosaic_0001>

<llo_original>
// kernel: tpu_custom_call.1
$region0: #{tpu_custom_call.1}
  #allocation0 [shape = 'u32[]', space=smem, size = 0x4, offset = 0x4, fixed_abs, tag = 'smem constant byte address 0x4 - core index']
  #allocation1 [shape = 'u32[72,128]{1,0:T(1,128)}', space=vmem, size = 0x9000, scoped, tag = 'internal scratch']
  %s0 = inlined_call_operand.hbm [shape: f32[4,8], index: 0, kind: input, shape index: {}]
  %s1 = inlined_call_operand.hbm [shape: f32[8,128], index: 1, kind: input, shape index: {}]
  %s2 = inlined_call_operand.hbm [shape: f32[128,128], index: 2, kind: input, shape index: {}]
  %s3 = inlined_call_operand.hbm [shape: f32[128,128], index: 3, kind: input, shape index: {}]
  %s4 = inlined_call_operand.hbm [shape: f32[8,128], index: 4, kind: input, shape index: {}]
  %s5 = inlined_call_operand.hbm [shape: f32[4,4], index: 5, kind: output, shape index: {}]
  %s6 = sld [smem:[#allocation0]]
  $region50: #{tpu_custom_call.1} parent=0
    _
  %s8 = ssub.s32 1, %s6
  %s9 = scalar_select 0, %s8, %s6
  $region1: #{tpu_custom_call.1} parent=0
    #allocation2 [shape = 'u8[2048]{0}', space=vmem, size = 0x800, scoped, tag = 'input window, operand 0, single buffered']
    #allocation3 [shape = 's32[1]{0}', space=sflag, size = 0x4, scoped, tag = 'scoped memory for tpu_custom_call.1']
    #allocation4 [shape = 's32[1]{0}', space=sflag, size = 0x4, scoped, tag = 'scoped memory for tpu_custom_call.1']
    #allocation5 [shape = 'u8[4096]{0}', space=vmem, size = 0x1000, scoped, tag = 'input window, operand 1, single buffered']
    #allocation6 [shape = 's32[1]{0}', space=sflag, size = 0x4, scoped, tag = 'scoped memory for tpu_custom_call.1']
    #allocation7 [shape = 'u8[65536]{0}', space=vmem, size = 0x10000, scoped, tag = 'input window, operand 2, single buffered']
    #allocation8 [shape = 'u8[65536]{0}', space=vmem, size = 0x10000, scoped, tag = 'input window, operand 3, single buffered']
    #allocation9 [shape = 's32[1]{0}', space=sflag, size = 0x4, scoped, tag = 'scoped memory for tpu_custom_call.1']
    #allocation10 [shape = 'u8[4096]{0}', space=vmem, size = 0x1000, scoped, tag = 'input window, operand 4, single buffered']
    #allocation11 [shape = 'u8[2048]{0}', space=vmem, size = 0x800, scoped, tag = 'output window, operand 0, single buffered']
    %10 = vsyncpa [#allocation3], 0
    %11 = vsyncpa [#allocation6], 0
    %12 = vsyncpa [#allocation9], 0
    %13 = vsyncpa [#allocation4], 0
    // Predicated region
    $region2: #{tpu_custom_call.1} parent=1 // pred_check
      _
    $region3: #{tpu_custom_call.1} parent=1 // pred_check_branch
      %15 = sbr.rel (0) target = $region5
    $region4: #{tpu_custom_call.1} parent=1 // pred_region
      %17 = vsyncadd [#allocation3], 0
      %s19 = sshll.u32 %s0, 4
      %s20 = int_to_ptr.hbm [resolvable:$true] %s19
      %s21 = sshll.u32 [#allocation2], 4
      %s22 = int_to_ptr.vmem [resolvable:$true] %s21
      %24 = dma.hbm_to_vmem [thread:$0]  %s20, 64, %s22, [#allocation3]
    $region5: #{tpu_custom_call.1} parent=1 // pred_fallthru
      _
    // Predicated region
    $region6: #{tpu_custom_call.1} parent=1 // pred_check
      _
    $region7: #{tpu_custom_call.1} parent=1 // pred_check_branch
      %26 = sbr.rel (0) target = $region9
    $region8: #{tpu_custom_call.1} parent=1 // pred_region
      %28 = vsyncadd [#allocation6], 0
      %s30 = sshll.u32 %s1, 4
      %s31 = int_to_ptr.hbm [resolvable:$true] %s30
      %s32 = sshll.u32 [#allocation5], 4
      %s33 = int_to_ptr.vmem [resolvable:$true] %s32
      %35 = dma.hbm_to_vmem [thread:$0]  %s31, 128, %s33, [#allocation6]
    $region9: #{tpu_custom_call.1} parent=1 // pred_fallthru
      _
    // Predicated region
    $region10: #{tpu_custom_call.1} parent=1 // pred_check
      _
    $region11: #{tpu_custom_call.1} parent=1 // pred_check_branch
      %37 = sbr.rel (0) target = $region13
    $region12: #{tpu_custom_call.1} parent=1 // pred_region
      %39 = vsyncadd [#allocation6], 0
      %s40 = sshll.u32 %s2, 4
      %s41 = int_to_ptr.hbm [resolvable:$true] %s40
      %s42 = sshll.u32 [#allocation7], 4
      %s43 = int_to_ptr.vmem [resolvable:$true] %s42
      %48 = dma.hbm_to_vmem [thread:$0]  %s41, 2048, %s43, [#allocation6], 128, 128, 8
    $region13: #{tpu_custom_call.1} parent=1 // pred_fallthru
      _
    // Predicated region
    $region14: #{tpu_custom_call.1} parent=1 // pred_check
      _
    $region15: #{tpu_custom_call.1} parent=1 // pred_check_branch
      %50 = sbr.rel (0) target = $region17
    $region16: #{tpu_custom_call.1} parent=1 // pred_region
      %52 = vsyncadd [#allocation9], 0
      %s53 = sshll.u32 %s3, 4
      %s54 = int_to_ptr.hbm [resolvable:$true] %s53
      %s55 = sshll.u32 [#allocation8], 4
      %s56 = int_to_ptr.vmem [resolvable:$true] %s55
      %61 = dma.hbm_to_vmem [thread:$0]  %s54, 2048, %s56, [#allocation9], 128, 128, 8
    $region17: #{tpu_custom_call.1} parent=1 // pred_fallthru
      _
    // Predicated region
    $region18: #{tpu_custom_call.1} parent=1 // pred_check
      _
    $region19: #{tpu_custom_call.1} parent=1 // pred_check_branch
      %63 = sbr.rel (0) target = $region21
    $region20: #{tpu_custom_call.1} parent=1 // pred_region
      %65 = vsyncadd [#allocation9], 0
      %s67 = sshll.u32 %s4, 4
      %s68 = int_to_ptr.hbm [resolvable:$true] %s67
      %s69 = sshll.u32 [#allocation10], 4
      %s70 = int_to_ptr.vmem [resolvable:$true] %s69
      %72 = dma.hbm_to_vmem [thread:$0]  %s68, 128, %s70, [#allocation9]
    $region21: #{tpu_custom_call.1} parent=1 // pred_fallthru
      _
    // Predicated region
    $region22: #{tpu_custom_call.1} parent=1 // pred_check
      _
    $region23: #{tpu_custom_call.1} parent=1 // pred_check_branch
      %74 = sbr.rel (0) target = $region25
    $region24: #{tpu_custom_call.1} parent=1 // pred_region
      %76 = dma.done [#allocation3], 64
    $region25: #{tpu_custom_call.1} parent=1 // pred_fallthru
      _
    // Predicated region
    $region26: #{tpu_custom_call.1} parent=1 // pred_check
      _
    $region27: #{tpu_custom_call.1} parent=1 // pred_check_branch
      %78 = sbr.rel (0) target = $region29
    $region28: #{tpu_custom_call.1} parent=1 // pred_region
      %80 = dma.done [#allocation6], 128
    $region29: #{tpu_custom_call.1} parent=1 // pred_fallthru
      _
    // Predicated region
    $region30: #{tpu_custom_call.1} parent=1 // pred_check
      _
    $region31: #{tpu_custom_call.1} parent=1 // pred_check_branch
      %82 = sbr.rel (0) target = $region33
    $region32: #{tpu_custom_call.1} parent=1 // pred_region
      %84 = dma.done [#allocation6], 2048
    $region33: #{tpu_custom_call.1} parent=1 // pred_fallthru
      _
    // Predicated region
    $region34: #{tpu_custom_call.1} parent=1 // pred_check
      _
    $region35: #{tpu_custom_call.1} parent=1 // pred_check_branch
      %86 = sbr.rel (0) target = $region37
    $region36: #{tpu_custom_call.1} parent=1 // pred_region
      %88 = dma.done [#allocation9], 2048
    $region37: #{tpu_custom_call.1} parent=1 // pred_fallthru
      _
    // Predicated region
    $region38: #{tpu_custom_call.1} parent=1 // pred_check
      _
    $region39: #{tpu_custom_call.1} parent=1 // pred_check_branch
      %90 = sbr.rel (0) target = $region41
    $region40: #{tpu_custom_call.1} parent=1 // pred_region
      %92 = dma.done [#allocation9], 128
    $region41: #{tpu_custom_call.1} parent=1 // pred_fallthru
      _
    %v93 = vld [vmem:[#allocation10] sm:$0x1]
    %v94 = vld [vmem:[#allocation10 + $0x1] sm:$0x1]
    %v95 = vld [vmem:[#allocation10 + $0x2] sm:$0x1]
    %v96 = vld [vmem:[#allocation10 + $0x3] sm:$0x1]
    %v97 = vld [vmem:[#allocation10 + $0x4] sm:$0x1]
    %v98 = vld [vmem:[#allocation10 + $0x5] sm:$0x1]
    %v99 = vld [vmem:[#allocation10 + $0x6] sm:$0x1]
    %v100 = vld [vmem:[#allocation2] sm:$0xf]
    %v101 = vld [vmem:[#allocation5] sm:$0xff]
    %v102 = vperm.slane %v93, 0
    %vm103 = vcmask 64512
    %v105 = vsel %vm103, %v100, 0
    %107 = vmatpush.msra.mxu0 0.0
    %108 = vmatpush.msra.mxu0 0.0
    %109 = vmatpush.msra.mxu0 0.0
    %110 = vmatpush.msra.mxu0 0.0
    %111 = vmatpush.msra.mxu0 0.0
    %112 = vmatpush.msra.mxu0 0.0
    %113 = vmatpush.msra.mxu0 0.0
    %114 = vmatpush.msra.mxu0 0.0
    %115 = vmatpush.msra.mxu0 0.0
    %116 = vmatpush.msra.mxu0 0.0
    %117 = vmatpush.msra.mxu0 0.0
    %118 = vmatpush.msra.mxu0 0.0
    %119 = vmatpush.msra.mxu0 0.0
    %120 = vmatpush.msra.mxu0 0.0
    %121 = vmatpush.msra.mxu0 0.0
    %122 = vmatpush.msra.mxu0 %v101
    %123 = vmatmul.f32.gmra.mxu0 %v105
    %v124 = vpop.f32.mrf.mxu0
    %v125 = vadd.f32 %v102, %v124
    %126 = vdwg.mxu0
    %v127 = vlaneseq
    %v128 = vand.u32 %v127, 127
    %vm129 = vcmp.lt.s32.totalorder %v128, 32
    %v130 = vsel %vm129, 1, 0
    %vm131 = vcmp.eq.s32.totalorder %v130, 1
    %v132 = vsel %vm131, %v125, 0.0
    %vm133 = vcmask 1043456
    %v134 = vsel %vm133, %v132, 0.0
    %135 = vadd.xlane.f32.xlu0 %v134
    %v136 = vpop.xlane.xlu0 %135
    %v137 = vmul.f32 %v136, 0.03125
    %v138 = vsub.f32 %v132, %v137
    %v139 = vsel %vm131, %v138, 0.0
    %v140 = vmul.f32 %v139, %v139
    %v141 = vsel %vm133, %v140, 0.0
    %142 = vadd.xlane.f32.xlu0 %v141
    %v143 = vpop.xlane.xlu0 %142
    %v144 = vmul.f32 %v143, 0.03125
    %v145 = vadd.f32 %v144, 1e-05
    %v146 = vrsqrt.pop %v145
    %v147 = vmul.f32 %v146, %v145
    %v148 = vmul.f32 %v147, %v146
    %v149 = vmul.f32 0.5, %v148
    %v150 = vsub.f32 1.5, %v149
    %v151 = vmul.f32 %v146, %v150
    %vm152 = vweird.f32 %v145
    %vm153 = vweird.f32 %v146
    %vm154 = vmor %vm152, %vm153
    %v155 = vsel %vm154, %v146, %v151
    %v156 = vmul.f32 %v139, %v155
    %v157 = vperm.slane %v94, 0
    %v158 = vmul.f32 %v156, %v157
    %v159 = vperm.slane %v95, 0
    %v160 = vadd.f32 %v158, %v159
    %v161 = vmax.f32 %v160, 0.0
    %v162 = vld [vmem:[#allocation7] sm:$0xff]
    %v163 = vld [vmem:[#allocation7 + $0x8] sm:$0xff]
    %v164 = vld [vmem:[#allocation7 + $0x10] sm:$0xff]
    %v165 = vld [vmem:[#allocation7 + $0x18] sm:$0xff]
    %v166 = vld [vmem:[#allocation7 + $0x20] sm:$0xff]
    %v167 = vld [vmem:[#allocation7 + $0x28] sm:$0xff]
    %v168 = vld [vmem:[#allocation7 + $0x30] sm:$0xff]
    %v169 = vld [vmem:[#allocation7 + $0x38] sm:$0xff]
    %v170 = vld [vmem:[#allocation7 + $0x40] sm:$0xff]
    %v171 = vld [vmem:[#allocation7 + $0x48] sm:$0xff]
    %v172 = vld [vmem:[#allocation7 + $0x50] sm:$0xff]
    %v173 = vld [vmem:[#allocation7 + $0x58] sm:$0xff]
    %v174 = vld [vmem:[#allocation7 + $0x60] sm:$0xff]
    %v175 = vld [vmem:[#allocation7 + $0x68] sm:$0xff]
    %v176 = vld [vmem:[#allocation7 + $0x70] sm:$0xff]
    %v177 = vld [vmem:[#allocation7 + $0x78] sm:$0xff]
    %v178 = vperm.slane %v96, 0
    %179 = vmatpush.msra.mxu0 %v177
    %180 = vmatpush.msra.mxu0 %v176
    %181 = vmatpush.msra.mxu0 %v175
    %182 = vmatpush.msra.mxu0 %v174
    %183 = vmatpush.msra.mxu0 %v173
    %184 = vmatpush.msra.mxu0 %v172
    %185 = vmatpush.msra.mxu0 %v171
    %186 = vmatpush.msra.mxu0 %v170
    %187 = vmatpush.msra.mxu0 %v169
    %188 = vmatpush.msra.mxu0 %v168
    %189 = vmatpush.msra.mxu0 %v167
    %190 = vmatpush.msra.mxu0 %v166
    %191 = vmatpush.msra.mxu0 %v165
    %192 = vmatpush.msra.mxu0 %v164
    %193 = vmatpush.msra.mxu0 %v163
    %194 = vmatpush.msra.mxu0 %v162
    %195 = vmatmul.f32.gmra.mxu0 %v161
    %v196 = vpop.f32.mrf.mxu0
    %v197 = vadd.f32 %v178, %v196
    %198 = vdwg.mxu0
    %v199 = vsel %vm131, %v197, 0.0
    %v200 = vsel %vm133, %v199, 0.0
    %201 = vadd.xlane.f32.xlu0 %v200
    %v202 = vpop.xlane.xlu0 %201
    %v203 = vmul.f32 %v202, 0.03125
    %v204 = vsub.f32 %v199, %v203
    %v205 = vsel %vm131, %v204, 0.0
    %v206 = vmul.f32 %v205, %v205
    %v207 = vsel %vm133, %v206, 0.0
    %208 = vadd.xlane.f32.xlu0 %v207
    %v209 = vpop.xlane.xlu0 %208
    %v210 = vmul.f32 %v209, 0.03125
    %v211 = vadd.f32 %v210, 1e-05
    %v212 = vrsqrt.pop %v211
    %v213 = vmul.f32 %v212, %v211
    %v214 = vmul.f32 %v213, %v212
    %v215 = vmul.f32 0.5, %v214
    %v216 = vsub.f32 1.5, %v215
    %v217 = vmul.f32 %v212, %v216
    %vm218 = vweird.f32 %v211
    %vm219 = vweird.f32 %v212
    %vm220 = vmor %vm218, %vm219
    %v221 = vsel %vm220, %v212, %v217
    %v222 = vmul.f32 %v205, %v221
    %v223 = vperm.slane %v97, 0
    %v224 = vmul.f32 %v222, %v223
    %v225 = vperm.slane %v98, 0
    %v226 = vadd.f32 %v224, %v225
    %v227 = vmax.f32 %v226, 0.0
    %v228 = vld [vmem:[#allocation8] sm:$0xff]
    %v229 = vld [vmem:[#allocation8 + $0x8] sm:$0xff]
    %v230 = vld [vmem:[#allocation8 + $0x10] sm:$0xff]
    %v231 = vld [vmem:[#allocation8 + $0x18] sm:$0xff]
    %v232 = vld [vmem:[#allocation8 + $0x20] sm:$0xff]
    %v233 = vld [vmem:[#allocation8 + $0x28] sm:$0xff]
    %v234 = vld [vmem:[#allocation8 + $0x30] sm:$0xff]
    %v235 = vld [vmem:[#allocation8 + $0x38] sm:$0xff]
    %v236 = vld [vmem:[#allocation8 + $0x40] sm:$0xff]
    %v237 = vld [vmem:[#allocation8 + $0x48] sm:$0xff]
    %v238 = vld [vmem:[#allocation8 + $0x50] sm:$0xff]
    %v239 = vld [vmem:[#allocation8 + $0x58] sm:$0xff]
    %v240 = vld [vmem:[#allocation8 + $0x60] sm:$0xff]
    %v241 = vld [vmem:[#allocation8 + $0x68] sm:$0xff]
    %v242 = vld [vmem:[#allocation8 + $0x70] sm:$0xff]
    %v243 = vld [vmem:[#allocation8 + $0x78] sm:$0xff]
    %v244 = vperm.slane %v99, 0
    %245 = vmatpush.msra.mxu0 %v243
    %246 = vmatpush.msra.mxu0 %v242
    %247 = vmatpush.msra.mxu0 %v241
    %248 = vmatpush.msra.mxu0 %v240
    %249 = vmatpush.msra.mxu0 %v239
    %250 = vmatpush.msra.mxu0 %v238
    %251 = vmatpush.msra.mxu0 %v237
    %252 = vmatpush.msra.mxu0 %v236
    %253 = vmatpush.msra.mxu0 %v235
    %254 = vmatpush.msra.mxu0 %v234
    %255 = vmatpush.msra.mxu0 %v233
    %256 = vmatpush.msra.mxu0 %v232
    %257 = vmatpush.msra.mxu0 %v231
    %258 = vmatpush.msra.mxu0 %v230
    %259 = vmatpush.msra.mxu0 %v229
    %260 = vmatpush.msra.mxu0 %v228
    %261 = vmatmul.f32.gmra.mxu0 %v227
    %v262 = vpop.f32.mrf.mxu0
    %v263 = vadd.f32 %v244, %v262
    %264 = vdwg.mxu0
    %v265 = vtanh.pop %v263
    %vm266 = vcmask 27648
    %267 = vst.msk [vmem:[#allocation11] sm:$0xf] %vm266, %v265
    // Predicated region
    $region42: #{tpu_custom_call.1} parent=1 // pred_check
      _
    $region43: #{tpu_custom_call.1} parent=1 // pred_check_branch
      %269 = sbr.rel (0) target = $region45
    $region44: #{tpu_custom_call.1} parent=1 // pred_region
      %271 = vsyncadd [#allocation4], 0
      %s273 = sshll.u32 [#allocation11], 4
      %s274 = int_to_ptr.vmem [resolvable:$true] %s273
      %s275 = sshll.u32 %s5, 4
      %s276 = int_to_ptr.hbm [resolvable:$true] %s275
      %278 = dma.vmem_to_hbm [thread:$0]  %s274, 64, %s276, [#allocation4]
    $region45: #{tpu_custom_call.1} parent=1 // pred_fallthru
      _
    // Predicated region
    $region46: #{tpu_custom_call.1} parent=1 // pred_check
      _
    $region47: #{tpu_custom_call.1} parent=1 // pred_check_branch
      %280 = sbr.rel (0) target = $region49
    $region48: #{tpu_custom_call.1} parent=1 // pred_region
      %282 = dma.done [#allocation4], 64
    $region49: #{tpu_custom_call.1} parent=1 // pred_fallthru
      _
    %283 = vsyncpa [#allocation3], 1
    %284 = vsyncpa [#allocation6], 1
    %285 = vsyncpa [#allocation9], 1
    %286 = vsyncpa [#allocation4], 1

</llo_original>
